<compile_context>
chip_gen: v6e
topology: v6e:2x2x1
jax: 0.10.0
libtpu: 0.0.40
codegen_flags: <defaults>
</compile_context>

<pallas_src>
import functools
import math

import jax
import jax.numpy as jnp
import numpy as np
from jax.experimental import pallas as pl
from jax.experimental.pallas import tpu as pltpu

BN_EPS = 1e-5


def _cdiv(a, b):
    return -(-a // b)


def _round_up(x, m):
    return (x + m - 1) // m * m


def _orepa_1x1_kernel(x_ref, w_ref, b_ref, o_ref):
    """One grid step: a (Cin, tn) slab of pixels -> (Cout, tn) outputs.

    x_ref : (Cin, tn)   activations (pixels on lanes), f32 or bf16
    w_ref : (Cout, Cin) fused weight = (W_origin*v0 + (C2@C1)*v1) * bn_scale (f32)
    b_ref : (Cout, 1)   fused bias   = beta - running_mean * bn_scale        (f32)
    o_ref : (Cout, tn)  output; f32 accumulate inside, cast only on store
    """
    # If x is bf16, jnp.dot promotes it to f32 in-register (a VPU cast of the
    # tile, no extra HBM traffic); the fused weight stays f32 for accuracy.
    acc = jnp.dot(w_ref[...], x_ref[...], preferred_element_type=jnp.float32)
    o_ref[...] = (acc + b_ref[...]).astype(o_ref.dtype)
    # nonlinear = nn.Identity() -> nothing to do.


@functools.partial(jax.jit, static_argnames=("tn", "stride", "out_dtype"))
def orepa_1x1_forward(x_nchw, w_origin, c1, c2, vector, bn_params, *,
                      tn=1024, stride=1, out_dtype=None):
    """x_nchw: (N, Cin, H, W).  Returns (N, Cout, H', W') in out_dtype
    (defaults to x's dtype)."""
    n, cin, h, w = x_nchw.shape
    cout = w_origin.shape[0]
    if out_dtype is None:
        out_dtype = x_nchw.dtype
    out_itemsize = jnp.dtype(out_dtype).itemsize

    # stride for a 1x1 conv with padding=0 is pure spatial subsampling.
    # TODO(synk): fold stride>1 subsampling into the kernel's index math
    # (pl.ds(..., stride=stride)) to avoid this extra gather pass; only
    # matters when stride>1 paths are hot.
    if stride != 1:
        x_nchw = x_nchw[:, :, ::stride, ::stride]
        n, cin, h, w = x_nchw.shape
    hw = h * w

    # ---- OREPA weight generation + BN folding: hoisted, done once, f32 ----
    w_origin2 = w_origin[:, :, 0, 0].astype(jnp.float32)               # (Cout, Cin)
    c1_2 = c1[:, :, 0, 0].astype(jnp.float32)                          # (T,   Cin)
    c2_2 = c2[:, :, 0, 0].astype(jnp.float32)                          # (Cout, T)
    w_l2i = jnp.dot(c2_2, c1_2, preferred_element_type=jnp.float32)    # (Cout, Cin)
    vec = vector.astype(jnp.float32)
    weight = w_origin2 * vec[0][:, None] + w_l2i * vec[1][:, None]
    gamma, beta, mean, var = [p.astype(jnp.float32) for p in bn_params]  # each (Cout,)
    bn_scale = gamma * jax.lax.rsqrt(var + BN_EPS)
    w_fused = weight * bn_scale[:, None]                                # (Cout, Cin) f32
    bias = (beta - mean * bn_scale)[:, None]                            # (Cout, 1)   f32

    # ---- pixels-on-lanes layout; NO pad-to-tile pass over x / output ------
    x3 = x_nchw.reshape(n, cin, hw)                 # free reshape, no transpose
    hw_arr = hw
    if hw < 128:
        # Tiny-input fallback: pad to a single 128-lane tile (< 128 pixels
        # total, negligible) instead of relying on a block wider than the
        # array extent.
        hw_arr = 128
        x3 = jnp.pad(x3, ((0, 0), (0, 0), (0, hw_arr - hw)))

    # Pixel tile: multiple of 128 that never exceeds the spatial extent; the
    # ragged final tile is handled by Pallas partial edge-block masking.
    tn_eff = min(tn, max(128, (hw_arr // 128) * 128))
    # v7x: make sure both TensorCores get work (>= 2 "parallel" grid steps).
    if n * _cdiv(hw_arr, tn_eff) < 2 and hw_arr > 128:
        tn_eff = max(128, _round_up(_cdiv(hw_arr, 2), 128))
    num_pix_tiles = _cdiv(hw_arr, tn_eff)
    grid = (n, num_pix_tiles)

    # ---- VMEM budget: what we actually need + headroom, capped well below
    # ---- v7x's 64 MiB physical VMEM, but above v5e's 16 MiB scoped default.
    x_itemsize = x3.dtype.itemsize
    need = (2 * cin * tn_eff * x_itemsize          # double-buffered x tiles
            + 2 * cout * tn_eff * out_itemsize     # double-buffered out tiles
            + 2 * cout * cin * 4 + 2 * cout * 4)   # weight + bias (upper bound)
    vmem_limit = int(min(max(need + (8 << 20), 32 << 20), 48 << 20))

    # Grid-invariant weight/bias: single-buffer only when it saves real VMEM
    # (>= 1 MiB), i.e. the large-channel v7x case the review targets.
    if cout * cin * 4 >= (1 << 20):
        w_spec = pl.BlockSpec((cout, cin), lambda b, i: (0, 0),
                              pipeline_mode=pl.Buffered(1))
        b_spec = pl.BlockSpec((cout, 1), lambda b, i: (0, 0),
                              pipeline_mode=pl.Buffered(1))
    else:
        w_spec = pl.BlockSpec((cout, cin), lambda b, i: (0, 0))
        b_spec = pl.BlockSpec((cout, 1), lambda b, i: (0, 0))

    flops = 2 * n * hw * cin * cout
    bytes_accessed = (n * cin * hw_arr * x_itemsize
                      + n * cout * hw_arr * out_itemsize
                      + cout * cin * 4 + cout * 4)

    out3 = pl.pallas_call(
        _orepa_1x1_kernel,
        out_shape=jax.ShapeDtypeStruct((n, cout, hw_arr), out_dtype),
        grid_spec=pltpu.PrefetchScalarGridSpec(
            num_scalar_prefetch=0,
            grid=grid,
            in_specs=[
                # batch dim squeezed (None) -> kernel sees 2-D (Cin, tn) tiles.
                pl.BlockSpec((None, cin, tn_eff), lambda b, i: (b, 0, i)),
                w_spec,
                b_spec,
            ],
            out_specs=pl.BlockSpec((None, cout, tn_eff), lambda b, i: (b, 0, i)),
        ),
        compiler_params=pltpu.CompilerParams(
            dimension_semantics=("parallel", "parallel"),
            vmem_limit_bytes=vmem_limit,
        ),
        cost_estimate=pl.CostEstimate(flops=flops, transcendentals=0,
                                      bytes_accessed=bytes_accessed),
    )(x3, w_fused, bias)

    if hw_arr != hw:           # only the tiny (< 128 pixel) fallback path
        out3 = out3[:, :, :hw]
    return out3.reshape(n, cout, h, w)


def _kaiming_uniform(key, shape, fan_in, a=math.sqrt(1.0)):
    bound = math.sqrt(6.0 / ((1.0 + a * a) * fan_in))
    return jax.random.uniform(key, shape, jnp.float32, -bound, bound)


def _reference_forward(x_nchw, w_origin, c1, c2, vector, bn_params, stride=1):
    """Pure-JAX reference mirroring the PyTorch graph (eval-mode BN)."""
    if stride != 1:
        x_nchw = x_nchw[:, :, ::stride, ::stride]
    w_l2i = jnp.einsum("tihw,othw->oihw", c1, c2)
    weight = (w_origin * vector[0][:, None, None, None]
              + w_l2i * vector[1][:, None, None, None])                 # (O, I, 1, 1)
    out = jnp.einsum("nihw,oi->nohw", x_nchw, weight[:, :, 0, 0])       # 1x1 conv
    gamma, beta, mean, var = bn_params
    scale = gamma / jnp.sqrt(var + BN_EPS)
    return out * scale[None, :, None, None] + (beta - mean * scale)[None, :, None, None]


if __name__ == "__main__":
    # Small shapes consistent with the module: N=2, Cin=4, Cout=8, spatial=16.
    N, CIN, COUT, H, W = 2, 4, 8, 16, 16
    key = jax.random.PRNGKey(0)
    k_x, k_x2, k_wo, k_c2, k_g, k_b, k_m, k_v = jax.random.split(key, 8)

    x = jax.random.normal(k_x, (N, CIN, H, W), jnp.float32)

    # Parameters per OREPA_1x1.__init__ (out_channels > in_channels branch):
    w_origin = _kaiming_uniform(k_wo, (COUT, CIN, 1, 1), fan_in=CIN)
    c1 = jnp.eye(CIN, dtype=jnp.float32)[:, :, None, None]              # (Cin, Cin, 1, 1)
    c2 = _kaiming_uniform(k_c2, (COUT, CIN, 1, 1), fan_in=CIN)          # (Cout, Cin, 1, 1)
    vector = jnp.stack([jnp.full((COUT,), 1.0, jnp.float32),
                        jnp.full((COUT,), 0.5, jnp.float32)], axis=0)   # (2, Cout)

    # BatchNorm2d parameters / running stats (deterministic, non-trivial).
    # TODO(synk): training-mode BN (batch statistics) is not implemented; this
    # kernel uses inference/running-stats semantics folded into weight+bias.
    gamma = 1.0 + 0.1 * jax.random.normal(k_g, (COUT,), jnp.float32)
    beta = 0.1 * jax.random.normal(k_b, (COUT,), jnp.float32)
    running_mean = 0.1 * jax.random.normal(k_m, (COUT,), jnp.float32)
    running_var = 1.0 + 0.1 * jnp.abs(jax.random.normal(k_v, (COUT,), jnp.float32))
    bn_params = jnp.stack([gamma, beta, running_mean, running_var], axis=0)  # (4, Cout)

    # 1) f32 streamed, HW a multiple of 128 (no edge block): strict tolerance.
    y_ref = _reference_forward(x, w_origin, c1, c2, vector, bn_params)
    y = jax.block_until_ready(
        orepa_1x1_forward(x, w_origin, c1, c2, vector, bn_params))
    np.testing.assert_allclose(np.asarray(y), np.asarray(y_ref),
                               rtol=1e-5, atol=1e-5)
    assert y.shape == (N, COUT, H, W)

    # 2) Ragged spatial extent (14x14 -> 196 pixels): validates the un-padded
    #    partial edge pixel tile (Pallas edge-block masking, no pad/slice pass).
    x_r = jax.random.normal(k_x2, (N, CIN, 14, 14), jnp.float32)
    y_r_ref = _reference_forward(x_r, w_origin, c1, c2, vector, bn_params)
    y_r = jax.block_until_ready(
        orepa_1x1_forward(x_r, w_origin, c1, c2, vector, bn_params))
    np.testing.assert_allclose(np.asarray(y_r), np.asarray(y_r_ref),
                               rtol=1e-5, atol=1e-5)

    # 3) stride=2 (1x1 conv, padding=0 -> spatial subsample); also exercises
    #    the HW < 128 tiny-input fallback.
    y_s_ref = _reference_forward(x, w_origin, c1, c2, vector, bn_params, stride=2)
    y_s = jax.block_until_ready(
        orepa_1x1_forward(x, w_origin, c1, c2, vector, bn_params, stride=2))
    np.testing.assert_allclose(np.asarray(y_s), np.asarray(y_s_ref),
                               rtol=1e-5, atol=1e-5)
    assert y_s.shape == (N, COUT, H // 2, W // 2)

    # 4) Producer-supplied bf16 activations + bf16 output store (fused weight
    #    and bias stay f32 inside the kernel).  Loose tolerance comes only
    #    from bf16 x / output quantization.
    y_bf16 = jax.block_until_ready(
        orepa_1x1_forward(x.astype(jnp.bfloat16), w_origin, c1, c2, vector,
                          bn_params, out_dtype=jnp.bfloat16))
    np.testing.assert_allclose(np.asarray(y_bf16).astype(np.float32),
                               np.asarray(y_ref), rtol=5e-2, atol=1e-1)

    print("KERNEL_OK")
</pallas_src>

<mosaic_0001>
module attributes {stable_mosaic.version = 11 : i64} {
  func.func @_orepa_1x1_kernel(%arg0: i32, %arg1: i32, %arg2: memref<1x4x256xf32, #tpu.memory_space<vmem>>, %arg3: memref<8x4xf32, #tpu.memory_space<vmem>>, %arg4: memref<8x1xf32, #tpu.memory_space<vmem>>, %arg5: memref<1x8x256xf32, #tpu.memory_space<vmem>>) attributes {dimension_semantics = [#tpu.dimension_semantics<parallel>, #tpu.dimension_semantics<parallel>], iteration_bounds = array<i64: 2, 1>, scalar_prefetch = 0 : i64, scratch_operands = 0 : i64, tpu.core_type = #tpu.core_type<tc>, window_params = [{transform_indices = @transform_0, window_bounds = array<i64: 1, 4, 256>}, {pipeline_mode = #tpu.pipeline_mode<synchronous>, transform_indices = @transform_1, window_bounds = array<i64: 8, 4>}, {pipeline_mode = #tpu.pipeline_mode<synchronous>, transform_indices = @transform_2, window_bounds = array<i64: 8, 1>}, {transform_indices = @transform_3, window_bounds = array<i64: 1, 8, 256>}]} {
    %c0 = arith.constant 0 : index
    %c0_0 = arith.constant 0 : index
    %0 = vector.load %arg3[%c0, %c0_0] : memref<8x4xf32, #tpu.memory_space<vmem>>, vector<8x4xf32>
    %c0_1 = arith.constant 0 : index
    %c0_2 = arith.constant 0 : index
    %c0_3 = arith.constant 0 : index
    %1 = vector.load %arg2[%c0_1, %c0_2, %c0_3] : memref<1x4x256xf32, #tpu.memory_space<vmem>>, vector<1x4x256xf32>
    %2 = vector.shape_cast %1 : vector<1x4x256xf32> to vector<4x256xf32>
    %cst = arith.constant dense<0.000000e+00> : vector<8x256xf32>
    %3 = tpu.matmul %0, %2, %cst {dimension_numbers = #tpu.dot_dimension_numbers<[1], [0], [0], [1], [0, 0, 1, 1], [], []>} : vector<8x4xf32>, vector<4x256xf32>, vector<8x256xf32> -> vector<8x256xf32>
    %c0_4 = arith.constant 0 : index
    %c0_5 = arith.constant 0 : index
    %4 = vector.load %arg4[%c0_4, %c0_5] : memref<8x1xf32, #tpu.memory_space<vmem>>, vector<8x1xf32>
    %5 = vector.broadcast %4 : vector<8x1xf32> to vector<8x256xf32>
    %6 = arith.addf %3, %5 : vector<8x256xf32>
    %c0_6 = arith.constant 0 : index
    %c0_7 = arith.constant 0 : index
    %c0_8 = arith.constant 0 : index
    %7 = vector.load %arg5[%c0_6, %c0_7, %c0_8] : memref<1x8x256xf32, #tpu.memory_space<vmem>>, vector<1x8x256xf32>
    %8 = vector.shape_cast %7 : vector<1x8x256xf32> to vector<8x256xf32>
    %9 = vector.shape_cast %6 : vector<8x256xf32> to vector<1x8x256xf32>
    tpu.vector_store %arg5[%c0_6, %c0_7, %c0_8], %9 {strides = array<i32>} : memref<1x8x256xf32, #tpu.memory_space<vmem>>, vector<1x8x256xf32>,
    return
  }
  func.func @transform_0(%arg0: i32, %arg1: i32) -> (i32, i32, i32) {
    %c0_i32 = arith.constant 0 : i32
    %c0_i32_0 = arith.constant 0 : i32
    return %arg0, %c0_i32, %arg1 : i32, i32, i32
  }
  func.func @transform_1(%arg0: i32, %arg1: i32) -> (i32, i32) {
    %c0_i32 = arith.constant 0 : i32
    %c0_i32_0 = arith.constant 0 : i32
    %c0_i32_1 = arith.constant 0 : i32
    return %c0_i32, %c0_i32_0 : i32, i32
  }
  func.func @transform_2(%arg0: i32, %arg1: i32) -> (i32, i32) {
    %c0_i32 = arith.constant 0 : i32
    %c0_i32_0 = arith.constant 0 : i32
    %c0_i32_1 = arith.constant 0 : i32
    return %c0_i32, %c0_i32_0 : i32, i32
  }
  func.func @transform_3(%arg0: i32, %arg1: i32) -> (i32, i32, i32) {
    %c0_i32 = arith.constant 0 : i32
    %c0_i32_0 = arith.constant 0 : i32
    return %arg0, %c0_i32, %arg1 : i32, i32, i32
  }
}

</mosaic_0001>

<llo_original>
// kernel: orepa_1x1_forward.1
$region0: #{orepa_1x1_forward.1}
  #allocation0 [shape = 'u32[]', space=smem, size = 0x4, offset = 0x4, fixed_abs, tag = 'smem constant byte address 0x4 - core index']
  #allocation1 [shape = 'u32[144,128]{1,0:T(1,128)}', space=vmem, size = 0x12000, scoped, tag = 'internal scratch']
  %s0 = inlined_call_operand.vmem [shape: f32[2,4,256], index: 0, kind: input, shape index: {}]
  %s1 = inlined_call_operand.vmem [shape: f32[8,4], index: 1, kind: input, shape index: {}]
  %s2 = inlined_call_operand.vmem [shape: f32[8,1], index: 2, kind: input, shape index: {}]
  %s3 = inlined_call_operand.vmem [shape: f32[2,8,256], index: 3, kind: output, shape index: {}]
  %s4 = sld [smem:[#allocation0]]
  $region45: #{orepa_1x1_forward.1} parent=0
    _
  %s6 = ssub.s32 1, %s4
  %s7 = scalar_select 0, %s6, %s4
  loop: start=0, step=1, limit=4
  $region2: #{orepa_1x1_forward.1} parent=0 // loop_pre_header
    _
  $region3: #{orepa_1x1_forward.1} parent=0 // loop_header
    %s9 = sphi 0, %s13
    %p10 = scmp.ge.s32.totalorder %s9, 4
    %s16 = sphi 0, %s28
    %s17 = sphi 0, %s24
    %s18 = sphi 0, %s16
    %s19 = sphi 0, %s17
    %s20 = sphi 0, %s18
    %s21 = sphi 0, %s19
    %s33 = sphi 0, %s35
    %s36 = sphi 0, %s33
    %s37 = sphi 0, %s36
    %s53 = sphi 0, %s37
    %s57 = sphi 0, %s57
    %s59 = sphi 0, %s57
    %s60 = sphi 0, %s59
    %s74 = sphi 0, %s60
    %s78 = sphi 0, %s78
    %s80 = sphi 0, %s78
    %s81 = sphi 0, %s80
    %s95 = sphi 0, %s81
    %s103 = sphi 0, %s105
    %s106 = sphi 0, %s103
    %s107 = sphi 0, %s106
    %s123 = sphi 0, %s107
  $region4: #{orepa_1x1_forward.1} parent=0 // loop_header_branch
    %12 = sbr.rel (%p10) target = $region8
  $region5: #{orepa_1x1_forward.1} parent=0 // loop_body
    %s14 = ssub.s32 %s9, 1
    %s15 = ssub.s32 %s9, 2
    %s22 = sadd.s32 1, %s17
    %p23 = scmp.ge.s32.totalorder %s22, 1
    %s24 = scalar_select %p23, 0, %s22
    %s25 = sadd.s32 1, %s16
    %s26 = scalar_select %p23, %s25, %s16
    %p27 = scmp.ge.s32.totalorder %s26, 2
    %s28 = scalar_select %p27, 0, %s26
    %s29 = ssub.s32 %s16, %s28
    %s30 = ssub.s32 %s17, %s24
    %s31 = sor.u32 %s29, %s30
    %p32 = scmp.eq.s32.totalorder %s31, 0
    %s34 = sadd.s32 %s33, 1
    %s35 = scalar_select %p32, %s33, %s34
    %p38 = pneg %p32
    %p39 = scmp.eq.s32.totalorder %s9, 1
    %p40 = por %p38, %p39
    %p41 = scmp.ne.s32.totalorder %s33, %s36
    %p42 = scmp.eq.s32.totalorder %s9, 0
    %p43 = por %p41, %p42
    %p44 = scmp.ne.s32.totalorder %s33, %s36
    %p45 = scmp.eq.s32.totalorder %s14, 1
    %p46 = por %p44, %p45
    %p47 = scmp.ne.s32.totalorder %s36, %s37
    %p48 = scmp.eq.s32.totalorder %s14, 0
    %p49 = por %p47, %p48
    %p50 = scmp.ne.s32.totalorder %s36, %s37
    %p51 = scmp.eq.s32.totalorder %s15, 1
    %p52 = por %p50, %p51
    %p54 = scmp.ne.s32.totalorder %s37, %s53
    %p55 = scmp.eq.s32.totalorder %s15, 0
    %p56 = por %p54, %p55
    %s58 = sadd.s32 %s57, 1
    %p61 = scmp.eq.s32.totalorder %s9, 1
    %p62 = scmp.ne.s32.totalorder %s57, %s59
    %p63 = scmp.eq.s32.totalorder %s9, 0
    %p64 = por %p62, %p63
    %p65 = scmp.ne.s32.totalorder %s57, %s59
    %p66 = scmp.eq.s32.totalorder %s14, 1
    %p67 = por %p65, %p66
    %p68 = scmp.ne.s32.totalorder %s59, %s60
    %p69 = scmp.eq.s32.totalorder %s14, 0
    %p70 = por %p68, %p69
    %p71 = scmp.ne.s32.totalorder %s59, %s60
    %p72 = scmp.eq.s32.totalorder %s15, 1
    %p73 = por %p71, %p72
    %p75 = scmp.ne.s32.totalorder %s60, %s74
    %p76 = scmp.eq.s32.totalorder %s15, 0
    %p77 = por %p75, %p76
    %s79 = sadd.s32 %s78, 1
    %p82 = scmp.eq.s32.totalorder %s9, 1
    %p83 = scmp.ne.s32.totalorder %s78, %s80
    %p84 = scmp.eq.s32.totalorder %s9, 0
    %p85 = por %p83, %p84
    %p86 = scmp.ne.s32.totalorder %s78, %s80
    %p87 = scmp.eq.s32.totalorder %s14, 1
    %p88 = por %p86, %p87
    %p89 = scmp.ne.s32.totalorder %s80, %s81
    %p90 = scmp.eq.s32.totalorder %s14, 0
    %p91 = por %p89, %p90
    %p92 = scmp.ne.s32.totalorder %s80, %s81
    %p93 = scmp.eq.s32.totalorder %s15, 1
    %p94 = por %p92, %p93
    %p96 = scmp.ne.s32.totalorder %s81, %s95
    %p97 = scmp.eq.s32.totalorder %s15, 0
    %p98 = por %p96, %p97
    %s99 = ssub.s32 %s16, %s28
    %s100 = ssub.s32 %s17, %s24
    %s101 = sor.u32 %s99, %s100
    %p102 = scmp.eq.s32.totalorder %s101, 0
    %s104 = sadd.s32 %s103, 1
    %s105 = scalar_select %p102, %s103, %s104
    %p108 = pneg %p102
    %p109 = scmp.eq.s32.totalorder %s9, 1
    %p110 = por %p108, %p109
    %p111 = scmp.ne.s32.totalorder %s103, %s106
    %p112 = scmp.eq.s32.totalorder %s9, 0
    %p113 = por %p111, %p112
    %p114 = scmp.ne.s32.totalorder %s103, %s106
    %p115 = scmp.eq.s32.totalorder %s14, 1
    %p116 = por %p114, %p115
    %p117 = scmp.ne.s32.totalorder %s106, %s107
    %p118 = scmp.eq.s32.totalorder %s14, 0
    %p119 = por %p117, %p118
    %p120 = scmp.ne.s32.totalorder %s106, %s107
    %p121 = scmp.eq.s32.totalorder %s15, 1
    %p122 = por %p120, %p121
    %p124 = scmp.ne.s32.totalorder %s107, %s123
    %p125 = scmp.eq.s32.totalorder %s15, 0
    %p126 = por %p124, %p125
    %p127 = scmp.le.s32.totalorder 1, %s9
    %p128 = scmp.lt.s32.totalorder %s9, 3
    %p129 = pnand %p127, %p128
    %p130 = pneg %p129
    // Predicated region
    $region9: #{orepa_1x1_forward.1} parent=5 // pred_check
      _
    $region10: #{orepa_1x1_forward.1} parent=5 // pred_check_branch
      %132 = sbr.rel (%p129) target = $region12
    $region11: #{orepa_1x1_forward.1} parent=5 // pred_region
      %s133 = ssub.s32 %s9, 1
      // Predicated region
      $region13: #{orepa_1x1_forward.1} parent=11 // pred_check
        %p134 = pneg %p70
      $region14: #{orepa_1x1_forward.1} parent=11 // pred_check_branch
        %136 = sbr.rel (%p134) target = $region16
      $region15: #{orepa_1x1_forward.1} parent=11 // pred_region
        _
      $region16: #{orepa_1x1_forward.1} parent=11 // pred_fallthru
        _
      // Predicated region
      $region17: #{orepa_1x1_forward.1} parent=11 // pred_check
        %p137 = pneg %p91
      $region18: #{orepa_1x1_forward.1} parent=11 // pred_check_branch
        %139 = sbr.rel (%p137) target = $region20
      $region19: #{orepa_1x1_forward.1} parent=11 // pred_region
        _
      $region20: #{orepa_1x1_forward.1} parent=11 // pred_fallthru
        _
    $region12: #{orepa_1x1_forward.1} parent=5 // pred_fallthru
      _
    %p140 = scmp.lt.s32.totalorder %s9, 2
    // Predicated region
    $region21: #{orepa_1x1_forward.1} parent=5 // pred_check
      %p141 = pneg %p140
    $region22: #{orepa_1x1_forward.1} parent=5 // pred_check_branch
      %143 = sbr.rel (%p141) target = $region24
    $region23: #{orepa_1x1_forward.1} parent=5 // pred_region
      // Predicated region
      $region25: #{orepa_1x1_forward.1} parent=23 // pred_check
        %p144 = pneg %p43
      $region26: #{orepa_1x1_forward.1} parent=23 // pred_check_branch
        %146 = sbr.rel (%p144) target = $region28
      $region27: #{orepa_1x1_forward.1} parent=23 // pred_region
        %s147 = smul.u32 2, %s17
        %p148 = scmp.lt.s32.totalorder %s16, 1
        %s149 = scalar_select %p148, %s16, 1
        %p150 = scmp.lt.s32.totalorder %s147, 1
        %s151 = scalar_select %p150, %s147, 1
        %s152 = smul.addr %s149, 2
        %s153 = sadd.s32 %s151, %s152
        %s154 = smul.addr %s153, 4
        %s155 = scalar_lea.vmem %s0, %s154
        %s156 = smul.u32 2, %s17
      $region28: #{orepa_1x1_forward.1} parent=23 // pred_fallthru
        _
    $region24: #{orepa_1x1_forward.1} parent=5 // pred_fallthru
      _
    %p157 = scmp.le.s32.totalorder 1, %s9
    %p158 = scmp.lt.s32.totalorder %s9, 3
    %p159 = pnand %p157, %p158
    %p160 = pneg %p159
    // Predicated region
    $region29: #{orepa_1x1_forward.1} parent=5 // pred_check
      _
    $region30: #{orepa_1x1_forward.1} parent=5 // pred_check_branch
      %162 = sbr.rel (%p159) target = $region32
    $region31: #{orepa_1x1_forward.1} parent=5 // pred_region
      %s163 = ssub.s32 %s9, 1
      %s164 = smul.u32 2, %s19
      %p165 = scmp.lt.s32.totalorder %s18, 1
      %s166 = scalar_select %p165, %s18, 1
      %p167 = scmp.lt.s32.totalorder %s164, 1
      %s168 = scalar_select %p167, %s164, 1
      %s169 = smul.addr %s166, 2
      %s170 = sadd.s32 %s168, %s169
      %s171 = smul.addr %s170, 4
      %s172 = scalar_lea.vmem %s0, %s171
      %p173 = pneg %p49
      %p174 = pneg %p46
      %p175 = pneg %p70
      %p176 = pneg %p67
      %p177 = pneg %p91
      %p178 = pneg %p88
      %p179 = pneg %p119
      %p180 = pneg %p116
      %s181 = smul.u32 2, %s19
      %p182 = scmp.lt.s32.totalorder %s18, 1
      %s183 = scalar_select %p182, %s18, 1
      %p184 = scmp.lt.s32.totalorder %s181, 1
      %s185 = scalar_select %p184, %s181, 1
      %s186 = smul.addr %s183, 2
      %s187 = sadd.s32 %s185, %s186
      %s188 = smul.addr %s187, 8
      %s189 = scalar_lea.vmem %s3, %s188
      %s190 = smul.u32 2, %s19
      %p191 = scmp.lt.s32.totalorder %s18, 1
      %s192 = scalar_select %p191, %s18, 1
      %p193 = scmp.lt.s32.totalorder %s190, 1
      %s194 = scalar_select %p193, %s190, 1
      %s195 = smul.addr %s192, 2
      %s196 = sadd.s32 %s194, %s195
      %s197 = smul.addr %s196, 4
      %s198 = scalar_lea.vmem %s0, %s197
      %s199 = smul.u32 2, %s19
      %s200 = smul.u32 2, %s19
      %p201 = scmp.lt.s32.totalorder %s18, 1
      %s202 = scalar_select %p201, %s18, 1
      %p203 = scmp.lt.s32.totalorder %s200, 1
      %s204 = scalar_select %p203, %s200, 1
      %s205 = smul.addr %s202, 2
      %s206 = sadd.s32 %s204, %s205
      %s207 = smul.addr %s206, 8
      %s208 = scalar_lea.vmem %s3, %s207
      %s209 = smul.u32 2, %s19
      %v210 = vld [vmem:[%s1] sm:$0xff]
      %v211 = vld [vmem:[%s198] sm:$0xff]
      %v212 = vld [vmem:[%s2] sm:$0xff]
      %214 = vset.pattern.permute.xlu0 0
      %215 = vperm.xlu0 %214, %v212
      %v216 = vpop.permute.xlu0 %215
      %v219 = vcombine.high %v211, %v211
      %vm220 = vcmask 31744
      %v222 = vsel %vm220, %v210, 0
      %vm224 = vcmask 1043456
      %v225 = vsel %vm224, %v211, 0
      %v227 = vsel %vm224, %v219, 0
      %229 = vmatprep.subr.mxu0 0.0
      %230 = vmatpush1.msra.mxu0 0.0
      %231 = vmatprep.subr.mxu0 0.0
      %232 = vmatpush1.msra.mxu0 0.0
      %233 = vmatprep.subr.mxu0 0.0
      %234 = vmatpush1.msra.mxu0 0.0
      %235 = vmatprep.subr.mxu0 0.0
      %236 = vmatpush1.msra.mxu0 0.0
      %237 = vmatprep.subr.mxu0 0.0
      %238 = vmatpush1.msra.mxu0 0.0
      %239 = vmatprep.subr.mxu0 0.0
      %240 = vmatpush1.msra.mxu0 0.0
      %241 = vmatprep.subr.mxu0 0.0
      %242 = vmatpush1.msra.mxu0 0.0
      %243 = vmatprep.subr.mxu0 0.0
      %244 = vmatpush1.msra.mxu0 0.0
      %245 = vmatprep.subr.mxu0 0.0
      %246 = vmatpush1.msra.mxu0 0.0
      %247 = vmatprep.subr.mxu0 0.0
      %248 = vmatpush1.msra.mxu0 0.0
      %249 = vmatprep.subr.mxu0 0.0
      %250 = vmatpush1.msra.mxu0 0.0
      %251 = vmatprep.subr.mxu0 0.0
      %252 = vmatpush1.msra.mxu0 0.0
      %253 = vmatprep.subr.mxu0 0.0
      %254 = vmatpush1.msra.mxu0 0.0
      %255 = vmatprep.subr.mxu0 0.0
      %256 = vmatpush1.msra.mxu0 0.0
      %257 = vmatprep.subr.mxu0 0.0
      %258 = vmatpush1.msra.mxu0 0.0
      %259 = vmatprep.subr.mxu0 %v227
      %260 = vmatpush1.msra.mxu0 %v225
      %261 = vmatprep.subr.mxu0 0.0
      %262 = vmatpush2.msra.mxu0 0.0
      %263 = vmatprep.subr.mxu0 0.0
      %264 = vmatpush2.msra.mxu0 0.0
      %265 = vmatprep.subr.mxu0 0.0
      %266 = vmatpush2.msra.mxu0 0.0
      %267 = vmatprep.subr.mxu0 0.0
      %268 = vmatpush2.msra.mxu0 0.0
      %269 = vmatprep.subr.mxu0 0.0
      %270 = vmatpush2.msra.mxu0 0.0
      %271 = vmatprep.subr.mxu0 0.0
      %272 = vmatpush2.msra.mxu0 0.0
      %273 = vmatprep.subr.mxu0 0.0
      %274 = vmatpush2.msra.mxu0 0.0
      %275 = vmatprep.subr.mxu0 0.0
      %276 = vmatpush2.msra.mxu0 0.0
      %277 = vmatprep.subr.mxu0 0.0
      %278 = vmatpush2.msra.mxu0 0.0
      %279 = vmatprep.subr.mxu0 0.0
      %280 = vmatpush2.msra.mxu0 0.0
      %281 = vmatprep.subr.mxu0 0.0
      %282 = vmatpush2.msra.mxu0 0.0
      %283 = vmatprep.subr.mxu0 0.0
      %284 = vmatpush2.msra.mxu0 0.0
      %285 = vmatprep.subr.mxu0 0.0
      %286 = vmatpush2.msra.mxu0 0.0
      %287 = vmatprep.subr.mxu0 0.0
      %288 = vmatpush2.msra.mxu0 0.0
      %289 = vmatprep.subr.mxu0 0.0
      %290 = vmatpush2.msra.mxu0 0.0
      %291 = vmatprep.subr.mxu0 0.0
      %292 = vmatpush2.msra.mxu0 0.0
      %293 = vmatprep.mubr.f32.mxu0 0.0
      %294 = vmatmul.mubr.f32.gmra.mxu0 %v222
      %v295 = vpop.f32.mrf.mxu0
      %v296 = vadd.f32 %v216, %v295
      %v297 = vpop.f32.mrf.mxu0
      %v298 = vadd.f32 %v216, %v297
      %299 = vdwg.mxu0
      %300 = vst [vmem:[%s208] sm:$0xff] %v296
      %301 = vst [vmem:[%s208 + $0x8] sm:$0xff] %v298
      %s302 = smul.u32 2, %s19
      %p303 = scmp.lt.s32.totalorder %s18, 1
      %s304 = scalar_select %p303, %s18, 1
      %p305 = scmp.lt.s32.totalorder %s302, 1
      %s306 = scalar_select %p305, %s302, 1
      %s307 = smul.addr %s304, 2
      %s308 = sadd.s32 %s306, %s307
      %s309 = smul.addr %s308, 8
      %s310 = scalar_lea.vmem %s3, %s309
      // Predicated region
      $region33: #{orepa_1x1_forward.1} parent=31 // pred_check
        %p311 = pneg %p116
      $region34: #{orepa_1x1_forward.1} parent=31 // pred_check_branch
        %313 = sbr.rel (%p311) target = $region36
      $region35: #{orepa_1x1_forward.1} parent=31 // pred_region
        %s314 = smul.u32 2, %s19
      $region36: #{orepa_1x1_forward.1} parent=31 // pred_fallthru
        _
    $region32: #{orepa_1x1_forward.1} parent=5 // pred_fallthru
      _
    %p315 = scmp.le.s32.totalorder 2, %s9
    // Predicated region
    $region37: #{orepa_1x1_forward.1} parent=5 // pred_check
      %p316 = pneg %p315
    $region38: #{orepa_1x1_forward.1} parent=5 // pred_check_branch
      %318 = sbr.rel (%p316) target = $region40
    $region39: #{orepa_1x1_forward.1} parent=5 // pred_region
      %s319 = ssub.s32 %s9, 2
      // Predicated region
      $region41: #{orepa_1x1_forward.1} parent=39 // pred_check
        %p320 = pneg %p122
      $region42: #{orepa_1x1_forward.1} parent=39 // pred_check_branch
        %322 = sbr.rel (%p320) target = $region44
      $region43: #{orepa_1x1_forward.1} parent=39 // pred_region
        %s323 = smul.u32 2, %s21
        %p324 = scmp.lt.s32.totalorder %s20, 1
        %s325 = scalar_select %p324, %s20, 1
        %p326 = scmp.lt.s32.totalorder %s323, 1
        %s327 = scalar_select %p326, %s323, 1
        %s328 = smul.addr %s325, 2
        %s329 = sadd.s32 %s327, %s328
        %s330 = smul.addr %s329, 8
        %s331 = scalar_lea.vmem %s3, %s330
      $region44: #{orepa_1x1_forward.1} parent=39 // pred_fallthru
        _
    $region40: #{orepa_1x1_forward.1} parent=5 // pred_fallthru
      _
  $region6: #{orepa_1x1_forward.1} parent=0 // loop_footer
    %s13 = sadd.s32 1, %s9
  $region7: #{orepa_1x1_forward.1} parent=0 // loop_footer_branch
    %8 = sbr.rel target = $region3
  $region8: #{orepa_1x1_forward.1} parent=0 // loop_exit
    _

</llo_original>
